<compile_context>
chip_gen: v6e
topology: v6e:2x2x1
jax: 0.10.0
libtpu: 0.0.40
codegen_flags: <defaults>
</compile_context>

<pallas_src>
import functools

import jax
import jax.numpy as jnp
from jax.experimental import pallas as pl
from jax.experimental.pallas import tpu as pltpu


def _round_up(v, m):
    return ((v + m - 1) // m) * m


def _sublane_unit(dtype):
    # Native second-minor tiling unit: f32 -> 8, bf16/f16 -> 16, int8 -> 32.
    return max(8, 32 // jnp.dtype(dtype).itemsize)


def _pad2d(a, rows, cols):
    # NOTE: padding MUST be exactly zero — zero weight rows/cols and zero bias
    # columns keep the lane-padding mathematically exact through every layer
    # (ReLU(0)=0 feeds zeros into the next layer's zero weight rows).
    pr, pc = rows - a.shape[0], cols - a.shape[1]
    if pr == 0 and pc == 0:
        return a
    return jnp.pad(a, ((0, pr), (0, pc)))


def _default_compute_dtype():
    # bf16 is the fast path on v6e/v7x (MXU rate + halved DMA); keep f32
    # elsewhere so the default numerics stay close to the PyTorch module.
    try:
        kind = jax.devices()[0].device_kind.lower()
    except Exception:
        return jnp.float32
    if "v6" in kind or "v7" in kind:
        return jnp.bfloat16
    return jnp.float32


def _fused_mlp_kernel(*refs, num_layers, compute_dtype):
    """One row-tile of the whole MLP.

    refs = (x, w_0..w_{L-1}, b_0..b_{L-1}, out[, act_scratch])
      x           : (TILE, in_pad)        original activation dtype
      w_i         : (din_pad, dout_pad)   compute_dtype (MXU operand)
      b_i         : (1, dout_pad)         f32 (bias add stays f32)
      out         : (TILE, out_pad)       f32 (f32 path) / compute_dtype
      act_scratch : (TILE, max_hidden_pad) compute_dtype VMEM scratch holding
                    the intermediate activation between layers (absent when
                    num_layers == 1).
    """
    x_ref = refs[0]
    w_refs = refs[1:1 + num_layers]
    b_refs = refs[1 + num_layers:1 + 2 * num_layers]
    o_ref = refs[1 + 2 * num_layers]
    act_ref = refs[2 + 2 * num_layers] if num_layers > 1 else None

    h = x_ref[...]
    if h.dtype != compute_dtype:
        h = h.astype(compute_dtype)  # cheap in-VMEM VPU cast of the tile
    for i in range(num_layers):
        # MXU matmul with f32 accumulation; bias add / ReLU stay in f32.
        y = jnp.dot(h, w_refs[i][...], preferred_element_type=jnp.float32)
        y = y + b_refs[i][...]
        if i < num_layers - 1:
            cols = w_refs[i].shape[1]
            act_ref[:, :cols] = jnp.maximum(y, 0.0).astype(act_ref.dtype)
            h = act_ref[:, :cols]
        else:
            o_ref[...] = y.astype(o_ref.dtype)


def _fused_mlp_pallas(x_p, ws, bs, *, tile, compute_dtype, out_dtype):
    """x_p: (N_pad, in_pad); ws[i]: (din_pad, dout_pad); bs[i]: (1, dout_pad)."""
    num_layers = len(ws)
    n_pad, in_pad = x_p.shape
    out_pad = ws[-1].shape[1]
    inter = [w.shape[1] for w in ws[:-1]]
    scratch_cols = max(inter) if inter else 0

    grid = (n_pad // tile,)

    in_specs = [pl.BlockSpec((tile, in_pad), lambda i: (i, 0))]
    # Weights/biases: full-extent blocks with a grid-invariant index_map ->
    # DMA'd once and kept resident in VMEM across all row tiles.
    # (pl.Buffered(1) single-buffering intentionally omitted; weights are tiny
    # here and the explicit vmem_limit below already accounts for 2 buffers.)
    in_specs += [pl.BlockSpec(w.shape, lambda i: (0, 0)) for w in ws]
    in_specs += [pl.BlockSpec(b.shape, lambda i: (0, 0)) for b in bs]

    scratch_shapes = []
    if num_layers > 1:
        scratch_shapes.append(pltpu.VMEM((tile, scratch_cols), compute_dtype))

    def nbytes(shape, dt):
        sz = jnp.dtype(dt).itemsize
        for d in shape:
            sz *= d
        return sz

    # Scoped-VMEM budget: default pipelining double-buffers every input block.
    needed = 2 * nbytes((tile, in_pad), x_p.dtype)
    needed += 2 * nbytes((tile, out_pad), out_dtype)
    needed += 2 * sum(nbytes(w.shape, w.dtype) for w in ws)
    needed += 2 * sum(nbytes(b.shape, b.dtype) for b in bs)
    if num_layers > 1:
        needed += nbytes((tile, scratch_cols), compute_dtype)
    vmem_limit = min(max(int(needed * 1.5) + (4 << 20), 16 << 20), 64 << 20)

    flops = 2 * n_pad * sum(w.shape[0] * w.shape[1] for w in ws)
    bytes_accessed = (nbytes(x_p.shape, x_p.dtype)
                      + sum(nbytes(w.shape, w.dtype) for w in ws)
                      + sum(nbytes(b.shape, b.dtype) for b in bs)
                      + nbytes((n_pad, out_pad), out_dtype))

    kernel = functools.partial(
        _fused_mlp_kernel, num_layers=num_layers, compute_dtype=compute_dtype)

    return pl.pallas_call(
        kernel,
        out_shape=jax.ShapeDtypeStruct((n_pad, out_pad), out_dtype),
        grid_spec=pltpu.PrefetchScalarGridSpec(
            num_scalar_prefetch=0,
            grid=grid,
            in_specs=in_specs,
            out_specs=pl.BlockSpec((tile, out_pad), lambda i: (i, 0)),
            scratch_shapes=scratch_shapes,
        ),
        compiler_params=pltpu.CompilerParams(
            # Row tiles are independent -> shard across TensorCores (2x v7x).
            dimension_semantics=("parallel",),
            vmem_limit_bytes=vmem_limit),
        cost_estimate=pl.CostEstimate(
            flops=flops, transcendentals=0, bytes_accessed=bytes_accessed),
    )(x_p, *ws, *bs)


class MLP:
    """JAX/Pallas port of the PyTorch MLP module.

    __init__ builds num_layers Linear layers:
        [input_dim -> hidden_dim] * (num_layers - 1), last -> output_dim,
    forward applies ReLU after every layer except the last one.
    """

    def __init__(self, input_dim, hidden_dim, output_dim, num_layers, key):
        self.num_layers = num_layers
        self.input_dim = input_dim
        self.output_dim = output_dim
        h = [hidden_dim] * (num_layers - 1)
        dims_in = [input_dim] + h
        dims_out = h + [output_dim]

        self.weights = []
        self.biases = []
        for n, k in zip(dims_in, dims_out):
            key, wk, bk = jax.random.split(key, 3)
            # Kaiming-uniform-like bound (torch.nn.Linear default), stored
            # already transposed: (in, out).
            bound = 1.0 / jnp.sqrt(jnp.float32(n))
            w = jax.random.uniform(wk, (n, k), jnp.float32, -bound, bound)
            b = jax.random.uniform(bk, (k,), jnp.float32, -bound, bound)
            self.weights.append(w)
            self.biases.append(b)

        # Pre-pad every feature dim to a multiple of 128 (lane width) so all
        # matmul operands and the output store are lane-aligned/lane-dense.
        self.weights_padded = []
        self.biases_padded = []
        for w, b in zip(self.weights, self.biases):
            ip = _round_up(w.shape[0], 128)
            op = _round_up(w.shape[1], 128)
            self.weights_padded.append(_pad2d(w, ip, op))
            self.biases_padded.append(_pad2d(b.reshape(1, -1), 1, op))

        # Per-compute-dtype weight cache: the cast is paid once, not per call.
        # Biases always stay f32 (bias add happens in f32 inside the kernel).
        self._w_cache = {jnp.dtype(jnp.float32): self.weights_padded}

    def _weights_for(self, compute_dtype):
        k = jnp.dtype(compute_dtype)
        if k not in self._w_cache:
            self._w_cache[k] = [w.astype(k) for w in self.weights_padded]
        return self._w_cache[k]

    def __call__(self, x, compute_dtype=None, tile_rows=512):
        if compute_dtype is None:
            compute_dtype = _default_compute_dtype()
        compute_dtype = jnp.dtype(compute_dtype)
        # bf16 path also writes bf16 output (halves output DMA); f32 stays f32.
        out_dtype = jnp.float32 if compute_dtype == jnp.float32 else compute_dtype

        # Flatten all leading dims; Linear acts on the last axis only.
        lead_shape = x.shape[:-1]
        xf = x.reshape(-1, x.shape[-1])
        n, d = xf.shape

        ws = self._weights_for(compute_dtype)
        bs = self.biases_padded
        in_pad = ws[0].shape[0]
        out_pad = ws[-1].shape[1]
        inter = [w.shape[1] for w in ws[:-1]]
        scratch_cols = max(inter) if inter else 0

        # Row tile: multiple of the sublane unit for every tile-shaped buffer,
        # capped by a VMEM budget, and split so the grid has >= 2 steps when
        # possible (keeps both v7x TensorCores busy via "parallel").
        unit = max(_sublane_unit(x.dtype), _sublane_unit(out_dtype),
                   _sublane_unit(compute_dtype))
        tile = max(unit,
                   (min(int(tile_rows), _round_up(max(n, 1), unit)) // unit) * unit)
        per_row = (2 * in_pad * jnp.dtype(x.dtype).itemsize
                   + 2 * out_pad * jnp.dtype(out_dtype).itemsize
                   + scratch_cols * compute_dtype.itemsize)
        cap = max(unit, ((12 << 20) // max(per_row, 1) // unit) * unit)
        tile = min(tile, cap)
        n_unit = _round_up(max(n, 1), unit)
        if tile >= n_unit and n_unit >= 2 * unit:
            tile = _round_up((n_unit + 1) // 2, unit)
        n_pad = _round_up(max(n, 1), tile)

        # Pad rows / input features only when necessary (single jnp.pad; no
        # zeros+set round-trip, no wrapper-side cast — the kernel casts the
        # tile to compute_dtype after the DMA).
        if n_pad != n or in_pad != d:
            x_p = jnp.pad(xf, ((0, n_pad - n), (0, in_pad - d)))
        else:
            x_p = xf

        out_p = _fused_mlp_pallas(x_p, ws, bs, tile=tile,
                                  compute_dtype=compute_dtype,
                                  out_dtype=out_dtype)

        out = out_p[:n, :self.output_dim]
        return out.reshape(*lead_shape, self.output_dim).astype(x.dtype)


def _reference_mlp(x, weights, biases, num_layers, compute_dtype=jnp.float32):
    """Pure-JAX reference (same matmul compute dtype, f32 accumulation)."""
    lead_shape = x.shape[:-1]
    xf = x.reshape(-1, x.shape[-1])
    for i in range(num_layers):
        y = jnp.dot(xf.astype(compute_dtype), weights[i].astype(compute_dtype),
                    preferred_element_type=jnp.float32) + biases[i]
        xf = jnp.maximum(y, 0.0) if i < num_layers - 1 else y
    return xf.reshape(*lead_shape, xf.shape[-1])


if __name__ == "__main__":
    key = jax.random.PRNGKey(0)
    key, xkey, mkey, m1key = jax.random.split(key, 4)

    # Small shapes consistent with the module's usage (query-embedding MLP):
    # batch=2, num_queries=8, input_dim=16 -> hidden=32 -> output_dim=4, 3 layers.
    batch, seq, input_dim, hidden_dim, output_dim, num_layers = 2, 8, 16, 32, 4, 3
    x = jax.random.normal(xkey, (batch, seq, input_dim), jnp.float32)

    mlp = MLP(input_dim, hidden_dim, output_dim, num_layers, mkey)

    # f32 compute path (matches the pure-JAX reference).
    out_f32 = jax.block_until_ready(mlp(x, compute_dtype=jnp.float32))
    ref_f32 = _reference_mlp(x, mlp.weights, mlp.biases, num_layers, jnp.float32)
    assert out_f32.shape == (batch, seq, output_dim), out_f32.shape
    assert jnp.allclose(out_f32, ref_f32, atol=1e-5, rtol=1e-5), (
        float(jnp.max(jnp.abs(out_f32 - ref_f32))))

    # bf16 matmul path (v6e/v7x fast path): bf16 weights/activations/output,
    # f32 accumulation.  Compare against a bf16 reference + loose f32 check.
    out_bf16 = jax.block_until_ready(mlp(x, compute_dtype=jnp.bfloat16))
    ref_bf16 = _reference_mlp(x, mlp.weights, mlp.biases, num_layers,
                              jnp.bfloat16)
    assert out_bf16.shape == (batch, seq, output_dim), out_bf16.shape
    assert jnp.allclose(out_bf16, ref_bf16, atol=2e-2, rtol=2e-2), (
        float(jnp.max(jnp.abs(out_bf16 - ref_bf16))))
    assert jnp.allclose(out_bf16, ref_f32, atol=5e-2, rtol=5e-2), (
        float(jnp.max(jnp.abs(out_bf16 - ref_f32))))

    # Auto compute-dtype (bf16 on v6e/v7x, f32 otherwise): loose sanity check.
    out_auto = jax.block_until_ready(mlp(x))
    assert out_auto.shape == (batch, seq, output_dim), out_auto.shape
    assert jnp.allclose(out_auto, ref_f32, atol=5e-2, rtol=5e-2)

    # Single-layer MLP exercises the no-scratch path.
    mlp1 = MLP(input_dim, hidden_dim, output_dim, 1, m1key)
    out1 = jax.block_until_ready(mlp1(x, compute_dtype=jnp.float32))
    ref1 = _reference_mlp(x, mlp1.weights, mlp1.biases, 1, jnp.float32)
    assert out1.shape == (batch, seq, output_dim), out1.shape
    assert jnp.allclose(out1, ref1, atol=1e-5, rtol=1e-5)

    print("KERNEL_OK")
</pallas_src>

<mosaic_0001>
module attributes {stable_mosaic.version = 11 : i64} {
  func.func @_fused_mlp_kernel(%arg0: i32, %arg1: memref<8x128xf32, #tpu.memory_space<vmem>>, %arg2: memref<128x128xf32, #tpu.memory_space<vmem>>, %arg3: memref<128x128xf32, #tpu.memory_space<vmem>>, %arg4: memref<128x128xf32, #tpu.memory_space<vmem>>, %arg5: memref<1x128xf32, #tpu.memory_space<vmem>>, %arg6: memref<1x128xf32, #tpu.memory_space<vmem>>, %arg7: memref<1x128xf32, #tpu.memory_space<vmem>>, %arg8: memref<8x128xf32, #tpu.memory_space<vmem>>, %arg9: memref<8x128xf32, #tpu.memory_space<vmem>>) attributes {dimension_semantics = [#tpu.dimension_semantics<parallel>], iteration_bounds = array<i64: 2>, scalar_prefetch = 0 : i64, scratch_operands = 1 : i64, tpu.core_type = #tpu.core_type<tc>, window_params = [{transform_indices = @transform_0, window_bounds = array<i64: 8, 128>}, {pipeline_mode = #tpu.pipeline_mode<synchronous>, transform_indices = @transform_1, window_bounds = array<i64: 128, 128>}, {pipeline_mode = #tpu.pipeline_mode<synchronous>, transform_indices = @transform_2, window_bounds = array<i64: 128, 128>}, {pipeline_mode = #tpu.pipeline_mode<synchronous>, transform_indices = @transform_3, window_bounds = array<i64: 128, 128>}, {pipeline_mode = #tpu.pipeline_mode<synchronous>, transform_indices = @transform_4, window_bounds = array<i64: 1, 128>}, {pipeline_mode = #tpu.pipeline_mode<synchronous>, transform_indices = @transform_5, window_bounds = array<i64: 1, 128>}, {pipeline_mode = #tpu.pipeline_mode<synchronous>, transform_indices = @transform_6, window_bounds = array<i64: 1, 128>}, {transform_indices = @transform_7, window_bounds = array<i64: 8, 128>}]} {
    %c0 = arith.constant 0 : index
    %c0_0 = arith.constant 0 : index
    %0 = vector.load %arg1[%c0, %c0_0] : memref<8x128xf32, #tpu.memory_space<vmem>>, vector<8x128xf32>
    %c0_1 = arith.constant 0 : index
    %c0_2 = arith.constant 0 : index
    %1 = vector.load %arg2[%c0_1, %c0_2] : memref<128x128xf32, #tpu.memory_space<vmem>>, vector<128x128xf32>
    %cst = arith.constant dense<0.000000e+00> : vector<8x128xf32>
    %2 = tpu.matmul %0, %1, %cst {dimension_numbers = #tpu.dot_dimension_numbers<[1], [0], [0], [1], [0, 0, 1, 1], [], []>} : vector<8x128xf32>, vector<128x128xf32>, vector<8x128xf32> -> vector<8x128xf32>
    %c0_3 = arith.constant 0 : index
    %c0_4 = arith.constant 0 : index
    %3 = vector.load %arg5[%c0_3, %c0_4] : memref<1x128xf32, #tpu.memory_space<vmem>>, vector<1x128xf32>
    %4 = vector.broadcast %3 : vector<1x128xf32> to vector<8x128xf32>
    %5 = arith.addf %2, %4 : vector<8x128xf32>
    %cst_5 = arith.constant 0.000000e+00 : f32
    %6 = vector.broadcast %cst_5 : f32 to vector<8x128xf32>
    %7 = arith.maximumf %5, %6 : vector<8x128xf32>
    %c0_6 = arith.constant 0 : index
    %c0_7 = arith.constant 0 : index
    %8 = vector.load %arg9[%c0_6, %c0_7] : memref<8x128xf32, #tpu.memory_space<vmem>>, vector<8x128xf32>
    tpu.vector_store %arg9[%c0_6, %c0_7], %7 {strides = array<i32>} : memref<8x128xf32, #tpu.memory_space<vmem>>, vector<8x128xf32>,
    %c0_8 = arith.constant 0 : index
    %c0_9 = arith.constant 0 : index
    %9 = vector.load %arg9[%c0_8, %c0_9] : memref<8x128xf32, #tpu.memory_space<vmem>>, vector<8x128xf32>
    %c0_10 = arith.constant 0 : index
    %c0_11 = arith.constant 0 : index
    %10 = vector.load %arg3[%c0_10, %c0_11] : memref<128x128xf32, #tpu.memory_space<vmem>>, vector<128x128xf32>
    %cst_12 = arith.constant dense<0.000000e+00> : vector<8x128xf32>
    %11 = tpu.matmul %9, %10, %cst_12 {dimension_numbers = #tpu.dot_dimension_numbers<[1], [0], [0], [1], [0, 0, 1, 1], [], []>} : vector<8x128xf32>, vector<128x128xf32>, vector<8x128xf32> -> vector<8x128xf32>
    %c0_13 = arith.constant 0 : index
    %c0_14 = arith.constant 0 : index
    %12 = vector.load %arg6[%c0_13, %c0_14] : memref<1x128xf32, #tpu.memory_space<vmem>>, vector<1x128xf32>
    %13 = vector.broadcast %12 : vector<1x128xf32> to vector<8x128xf32>
    %14 = arith.addf %11, %13 : vector<8x128xf32>
    %cst_15 = arith.constant 0.000000e+00 : f32
    %15 = vector.broadcast %cst_15 : f32 to vector<8x128xf32>
    %16 = arith.maximumf %14, %15 : vector<8x128xf32>
    %c0_16 = arith.constant 0 : index
    %c0_17 = arith.constant 0 : index
    %17 = vector.load %arg9[%c0_16, %c0_17] : memref<8x128xf32, #tpu.memory_space<vmem>>, vector<8x128xf32>
    tpu.vector_store %arg9[%c0_16, %c0_17], %16 {strides = array<i32>} : memref<8x128xf32, #tpu.memory_space<vmem>>, vector<8x128xf32>,
    %c0_18 = arith.constant 0 : index
    %c0_19 = arith.constant 0 : index
    %18 = vector.load %arg9[%c0_18, %c0_19] : memref<8x128xf32, #tpu.memory_space<vmem>>, vector<8x128xf32>
    %c0_20 = arith.constant 0 : index
    %c0_21 = arith.constant 0 : index
    %19 = vector.load %arg4[%c0_20, %c0_21] : memref<128x128xf32, #tpu.memory_space<vmem>>, vector<128x128xf32>
    %cst_22 = arith.constant dense<0.000000e+00> : vector<8x128xf32>
    %20 = tpu.matmul %18, %19, %cst_22 {dimension_numbers = #tpu.dot_dimension_numbers<[1], [0], [0], [1], [0, 0, 1, 1], [], []>} : vector<8x128xf32>, vector<128x128xf32>, vector<8x128xf32> -> vector<8x128xf32>
    %c0_23 = arith.constant 0 : index
    %c0_24 = arith.constant 0 : index
    %21 = vector.load %arg7[%c0_23, %c0_24] : memref<1x128xf32, #tpu.memory_space<vmem>>, vector<1x128xf32>
    %22 = vector.broadcast %21 : vector<1x128xf32> to vector<8x128xf32>
    %23 = arith.addf %20, %22 : vector<8x128xf32>
    %c0_25 = arith.constant 0 : index
    %c0_26 = arith.constant 0 : index
    %24 = vector.load %arg8[%c0_25, %c0_26] : memref<8x128xf32, #tpu.memory_space<vmem>>, vector<8x128xf32>
    tpu.vector_store %arg8[%c0_25, %c0_26], %23 {strides = array<i32>} : memref<8x128xf32, #tpu.memory_space<vmem>>, vector<8x128xf32>,
    return
  }
  func.func @transform_0(%arg0: i32) -> (i32, i32) {
    %c0_i32 = arith.constant 0 : i32
    %c0_i32_0 = arith.constant 0 : i32
    return %arg0, %c0_i32 : i32, i32
  }
  func.func @transform_1(%arg0: i32) -> (i32, i32) {
    %c0_i32 = arith.constant 0 : i32
    %c0_i32_0 = arith.constant 0 : i32
    %c0_i32_1 = arith.constant 0 : i32
    return %c0_i32, %c0_i32_0 : i32, i32
  }
  func.func @transform_2(%arg0: i32) -> (i32, i32) {
    %c0_i32 = arith.constant 0 : i32
    %c0_i32_0 = arith.constant 0 : i32
    %c0_i32_1 = arith.constant 0 : i32
    return %c0_i32, %c0_i32_0 : i32, i32
  }
  func.func @transform_3(%arg0: i32) -> (i32, i32) {
    %c0_i32 = arith.constant 0 : i32
    %c0_i32_0 = arith.constant 0 : i32
    %c0_i32_1 = arith.constant 0 : i32
    return %c0_i32, %c0_i32_0 : i32, i32
  }
  func.func @transform_4(%arg0: i32) -> (i32, i32) {
    %c0_i32 = arith.constant 0 : i32
    %c0_i32_0 = arith.constant 0 : i32
    %c0_i32_1 = arith.constant 0 : i32
    return %c0_i32, %c0_i32_0 : i32, i32
  }
  func.func @transform_5(%arg0: i32) -> (i32, i32) {
    %c0_i32 = arith.constant 0 : i32
    %c0_i32_0 = arith.constant 0 : i32
    %c0_i32_1 = arith.constant 0 : i32
    return %c0_i32, %c0_i32_0 : i32, i32
  }
  func.func @transform_6(%arg0: i32) -> (i32, i32) {
    %c0_i32 = arith.constant 0 : i32
    %c0_i32_0 = arith.constant 0 : i32
    %c0_i32_1 = arith.constant 0 : i32
    return %c0_i32, %c0_i32_0 : i32, i32
  }
  func.func @transform_7(%arg0: i32) -> (i32, i32) {
    %c0_i32 = arith.constant 0 : i32
    %c0_i32_0 = arith.constant 0 : i32
    return %arg0, %c0_i32 : i32, i32
  }
}

</mosaic_0001>

<llo_original>
// kernel: tpu_custom_call.1
$region0: #{tpu_custom_call.1}
  #allocation0 [shape = 'u32[]', space=smem, size = 0x4, offset = 0x4, fixed_abs, tag = 'smem constant byte address 0x4 - core index']
  #allocation1 [shape = 'u32[144,128]{1,0:T(1,128)}', space=vmem, size = 0x12000, scoped, tag = 'internal scratch']
  #allocation2 [shape = 'f32[8,128]{1,0:T(8,128)}', space=vmem, size = 0x1000, scoped, tag = 'scratch operand']
  %s0 = inlined_call_operand.hbm [shape: f32[16,128], index: 0, kind: input, shape index: {}]
  %s1 = inlined_call_operand.hbm [shape: f32[128,128], index: 1, kind: input, shape index: {}]
  %s2 = inlined_call_operand.hbm [shape: f32[128,128], index: 2, kind: input, shape index: {}]
  %s3 = inlined_call_operand.hbm [shape: f32[128,128], index: 3, kind: input, shape index: {}]
  %s4 = inlined_call_operand.vmem [shape: f32[1,128], index: 4, kind: input, shape index: {}]
  %s5 = inlined_call_operand.vmem [shape: f32[1,128], index: 5, kind: input, shape index: {}]
  %s6 = inlined_call_operand.vmem [shape: f32[1,128], index: 6, kind: input, shape index: {}]
  %s7 = inlined_call_operand.hbm [shape: f32[16,128], index: 7, kind: output, shape index: {}]
  %s8 = sld [smem:[#allocation0]]
  $region77: #{tpu_custom_call.1} parent=0
    _
  %s10 = ssub.s32 1, %s8
  %s11 = scalar_select 0, %s10, %s8
  $region1: #{tpu_custom_call.1} parent=0
    #allocation3 [shape = 'u8[8192]{0}', space=vmem, size = 0x2000, scoped, tag = 'input window, operand 0']
    #allocation4 [shape = 's32[2]{0}', space=sflag, size = 0x8, scoped, tag = 'scoped memory for tpu_custom_call.1']
    #allocation5 [shape = 's32[2]{0}', space=sflag, size = 0x8, scoped, tag = 'scoped memory for tpu_custom_call.1']
    #allocation6 [shape = 'u8[65536]{0}', space=vmem, size = 0x10000, scoped, tag = 'input window, operand 1, single buffered']
    #allocation7 [shape = 's32[1]{0}', space=sflag, size = 0x4, scoped, tag = 'scoped memory for tpu_custom_call.1']
    #allocation8 [shape = 'u8[65536]{0}', space=vmem, size = 0x10000, scoped, tag = 'input window, operand 2, single buffered']
    #allocation9 [shape = 'u8[65536]{0}', space=vmem, size = 0x10000, scoped, tag = 'input window, operand 3, single buffered']
    #allocation10 [shape = 's32[1]{0}', space=sflag, size = 0x4, scoped, tag = 'scoped memory for tpu_custom_call.1']
    #allocation11 [shape = 'u8[8192]{0}', space=vmem, size = 0x2000, scoped, tag = 'output window, operand 0']
    %12 = vsyncpa [#allocation4], 0
    %s13 = scalar_lea.sflag [#allocation4], 1
    %14 = vsyncpa %s13, 0
    %15 = vsyncpa [#allocation7], 0
    %16 = vsyncpa [#allocation10], 0
    %17 = vsyncpa [#allocation5], 0
    %s18 = scalar_lea.sflag [#allocation5], 1
    %19 = vsyncpa %s18, 0
    loop: start=0, step=1, limit=4
    $region2: #{tpu_custom_call.1} parent=1 // loop_pre_header
      _
    $region3: #{tpu_custom_call.1} parent=1 // loop_header
      %s21 = sphi 0, %s25
      %p22 = scmp.ge.s32.totalorder %s21, 4
      %s31 = sphi 0, %s33
      %s34 = sphi 0, %s31
      %s35 = sphi 0, %s34
      %s51 = sphi 0, %s35
      %s55 = sphi 0, %s55
      %s57 = sphi 0, %s55
      %s58 = sphi 0, %s57
      %s72 = sphi 0, %s58
      %s76 = sphi 0, %s76
      %s78 = sphi 0, %s76
      %s79 = sphi 0, %s78
      %s93 = sphi 0, %s79
      %s97 = sphi 0, %s97
      %s99 = sphi 0, %s97
      %s100 = sphi 0, %s99
      %s114 = sphi 0, %s100
      %s118 = sphi 0, %s118
      %s120 = sphi 0, %s118
      %s121 = sphi 0, %s120
      %s135 = sphi 0, %s121
      %s139 = sphi 0, %s139
      %s141 = sphi 0, %s139
      %s142 = sphi 0, %s141
      %s156 = sphi 0, %s142
      %s160 = sphi 0, %s160
      %s162 = sphi 0, %s160
      %s163 = sphi 0, %s162
      %s177 = sphi 0, %s163
      %s183 = sphi 0, %s185
      %s186 = sphi 0, %s183
      %s187 = sphi 0, %s186
      %s203 = sphi 0, %s187
    $region4: #{tpu_custom_call.1} parent=1 // loop_header_branch
      %24 = sbr.rel (%p22) target = $region8
    $region5: #{tpu_custom_call.1} parent=1 // loop_body
      %s26 = ssub.s32 %s21, 1
      %s27 = ssub.s32 %s21, 2
      %s28 = sadd.s32 %s21, 1
      %s29 = ssub.s32 %s21, %s28
      %p30 = scmp.eq.s32.totalorder %s29, 0
      %s32 = sadd.s32 %s31, 1
      %s33 = scalar_select %p30, %s31, %s32
      %p36 = pneg %p30
      %p37 = scmp.eq.s32.totalorder %s21, 1
      %p38 = por %p36, %p37
      %p39 = scmp.ne.s32.totalorder %s31, %s34
      %p40 = scmp.eq.s32.totalorder %s21, 0
      %p41 = por %p39, %p40
      %p42 = scmp.ne.s32.totalorder %s31, %s34
      %p43 = scmp.eq.s32.totalorder %s26, 1
      %p44 = por %p42, %p43
      %p45 = scmp.ne.s32.totalorder %s34, %s35
      %p46 = scmp.eq.s32.totalorder %s26, 0
      %p47 = por %p45, %p46
      %p48 = scmp.ne.s32.totalorder %s34, %s35
      %p49 = scmp.eq.s32.totalorder %s27, 1
      %p50 = por %p48, %p49
      %p52 = scmp.ne.s32.totalorder %s35, %s51
      %p53 = scmp.eq.s32.totalorder %s27, 0
      %p54 = por %p52, %p53
      %s56 = sadd.s32 %s55, 1
      %p59 = scmp.eq.s32.totalorder %s21, 1
      %p60 = scmp.ne.s32.totalorder %s55, %s57
      %p61 = scmp.eq.s32.totalorder %s21, 0
      %p62 = por %p60, %p61
      %p63 = scmp.ne.s32.totalorder %s55, %s57
      %p64 = scmp.eq.s32.totalorder %s26, 1
      %p65 = por %p63, %p64
      %p66 = scmp.ne.s32.totalorder %s57, %s58
      %p67 = scmp.eq.s32.totalorder %s26, 0
      %p68 = por %p66, %p67
      %p69 = scmp.ne.s32.totalorder %s57, %s58
      %p70 = scmp.eq.s32.totalorder %s27, 1
      %p71 = por %p69, %p70
      %p73 = scmp.ne.s32.totalorder %s58, %s72
      %p74 = scmp.eq.s32.totalorder %s27, 0
      %p75 = por %p73, %p74
      %s77 = sadd.s32 %s76, 1
      %p80 = scmp.eq.s32.totalorder %s21, 1
      %p81 = scmp.ne.s32.totalorder %s76, %s78
      %p82 = scmp.eq.s32.totalorder %s21, 0
      %p83 = por %p81, %p82
      %p84 = scmp.ne.s32.totalorder %s76, %s78
      %p85 = scmp.eq.s32.totalorder %s26, 1
      %p86 = por %p84, %p85
      %p87 = scmp.ne.s32.totalorder %s78, %s79
      %p88 = scmp.eq.s32.totalorder %s26, 0
      %p89 = por %p87, %p88
      %p90 = scmp.ne.s32.totalorder %s78, %s79
      %p91 = scmp.eq.s32.totalorder %s27, 1
      %p92 = por %p90, %p91
      %p94 = scmp.ne.s32.totalorder %s79, %s93
      %p95 = scmp.eq.s32.totalorder %s27, 0
      %p96 = por %p94, %p95
      %s98 = sadd.s32 %s97, 1
      %p101 = scmp.eq.s32.totalorder %s21, 1
      %p102 = scmp.ne.s32.totalorder %s97, %s99
      %p103 = scmp.eq.s32.totalorder %s21, 0
      %p104 = por %p102, %p103
      %p105 = scmp.ne.s32.totalorder %s97, %s99
      %p106 = scmp.eq.s32.totalorder %s26, 1
      %p107 = por %p105, %p106
      %p108 = scmp.ne.s32.totalorder %s99, %s100
      %p109 = scmp.eq.s32.totalorder %s26, 0
      %p110 = por %p108, %p109
      %p111 = scmp.ne.s32.totalorder %s99, %s100
      %p112 = scmp.eq.s32.totalorder %s27, 1
      %p113 = por %p111, %p112
      %p115 = scmp.ne.s32.totalorder %s100, %s114
      %p116 = scmp.eq.s32.totalorder %s27, 0
      %p117 = por %p115, %p116
      %s119 = sadd.s32 %s118, 1
      %p122 = scmp.eq.s32.totalorder %s21, 1
      %p123 = scmp.ne.s32.totalorder %s118, %s120
      %p124 = scmp.eq.s32.totalorder %s21, 0
      %p125 = por %p123, %p124
      %p126 = scmp.ne.s32.totalorder %s118, %s120
      %p127 = scmp.eq.s32.totalorder %s26, 1
      %p128 = por %p126, %p127
      %p129 = scmp.ne.s32.totalorder %s120, %s121
      %p130 = scmp.eq.s32.totalorder %s26, 0
      %p131 = por %p129, %p130
      %p132 = scmp.ne.s32.totalorder %s120, %s121
      %p133 = scmp.eq.s32.totalorder %s27, 1
      %p134 = por %p132, %p133
      %p136 = scmp.ne.s32.totalorder %s121, %s135
      %p137 = scmp.eq.s32.totalorder %s27, 0
      %p138 = por %p136, %p137
      %s140 = sadd.s32 %s139, 1
      %p143 = scmp.eq.s32.totalorder %s21, 1
      %p144 = scmp.ne.s32.totalorder %s139, %s141
      %p145 = scmp.eq.s32.totalorder %s21, 0
      %p146 = por %p144, %p145
      %p147 = scmp.ne.s32.totalorder %s139, %s141
      %p148 = scmp.eq.s32.totalorder %s26, 1
      %p149 = por %p147, %p148
      %p150 = scmp.ne.s32.totalorder %s141, %s142
      %p151 = scmp.eq.s32.totalorder %s26, 0
      %p152 = por %p150, %p151
      %p153 = scmp.ne.s32.totalorder %s141, %s142
      %p154 = scmp.eq.s32.totalorder %s27, 1
      %p155 = por %p153, %p154
      %p157 = scmp.ne.s32.totalorder %s142, %s156
      %p158 = scmp.eq.s32.totalorder %s27, 0
      %p159 = por %p157, %p158
      %s161 = sadd.s32 %s160, 1
      %p164 = scmp.eq.s32.totalorder %s21, 1
      %p165 = scmp.ne.s32.totalorder %s160, %s162
      %p166 = scmp.eq.s32.totalorder %s21, 0
      %p167 = por %p165, %p166
      %p168 = scmp.ne.s32.totalorder %s160, %s162
      %p169 = scmp.eq.s32.totalorder %s26, 1
      %p170 = por %p168, %p169
      %p171 = scmp.ne.s32.totalorder %s162, %s163
      %p172 = scmp.eq.s32.totalorder %s26, 0
      %p173 = por %p171, %p172
      %p174 = scmp.ne.s32.totalorder %s162, %s163
      %p175 = scmp.eq.s32.totalorder %s27, 1
      %p176 = por %p174, %p175
      %p178 = scmp.ne.s32.totalorder %s163, %s177
      %p179 = scmp.eq.s32.totalorder %s27, 0
      %p180 = por %p178, %p179
      %s181 = ssub.s32 %s21, %s28
      %p182 = scmp.eq.s32.totalorder %s181, 0
      %s184 = sadd.s32 %s183, 1
      %s185 = scalar_select %p182, %s183, %s184
      %p188 = pneg %p182
      %p189 = scmp.eq.s32.totalorder %s21, 1
      %p190 = por %p188, %p189
      %p191 = scmp.ne.s32.totalorder %s183, %s186
      %p192 = scmp.eq.s32.totalorder %s21, 0
      %p193 = por %p191, %p192
      %p194 = scmp.ne.s32.totalorder %s183, %s186
      %p195 = scmp.eq.s32.totalorder %s26, 1
      %p196 = por %p194, %p195
      %p197 = scmp.ne.s32.totalorder %s186, %s187
      %p198 = scmp.eq.s32.totalorder %s26, 0
      %p199 = por %p197, %p198
      %p200 = scmp.ne.s32.totalorder %s186, %s187
      %p201 = scmp.eq.s32.totalorder %s27, 1
      %p202 = por %p200, %p201
      %p204 = scmp.ne.s32.totalorder %s187, %s203
      %p205 = scmp.eq.s32.totalorder %s27, 0
      %p206 = por %p204, %p205
      %p207 = scmp.le.s32.totalorder 1, %s21
      %p208 = scmp.lt.s32.totalorder %s21, 3
      %p209 = pnand %p207, %p208
      %p210 = pneg %p209
      // Predicated region
      $region9: #{tpu_custom_call.1} parent=5 // pred_check
        _
      $region10: #{tpu_custom_call.1} parent=5 // pred_check_branch
        %212 = sbr.rel (%p209) target = $region12
      $region11: #{tpu_custom_call.1} parent=5 // pred_region
        %s213 = ssub.s32 %s21, 1
        // Predicated region
        $region13: #{tpu_custom_call.1} parent=11 // pred_check
          %p214 = pneg %p68
        $region14: #{tpu_custom_call.1} parent=11 // pred_check_branch
          %216 = sbr.rel (%p214) target = $region16
        $region15: #{tpu_custom_call.1} parent=11 // pred_region
          %s218 = ssub.s32 2048, 2048
          %219 = vsyncadd [#allocation7], %s218
          %s220 = sshll.u32 [#allocation6], 4
          %s221 = int_to_ptr.vmem [resolvable:$true] %s220
          %226 = dma.hbm_to_vmem [thread:$0]  %s1, 2048, %s221, [#allocation7], 128, 128, 8
        $region16: #{tpu_custom_call.1} parent=11 // pred_fallthru
          _
        // Predicated region
        $region17: #{tpu_custom_call.1} parent=11 // pred_check
          %p227 = pneg %p89
        $region18: #{tpu_custom_call.1} parent=11 // pred_check_branch
          %229 = sbr.rel (%p227) target = $region20
        $region19: #{tpu_custom_call.1} parent=11 // pred_region
          %s231 = ssub.s32 2048, 2048
          %232 = vsyncadd [#allocation7], %s231
          %s233 = sshll.u32 [#allocation8], 4
          %s234 = int_to_ptr.vmem [resolvable:$true] %s233
          %239 = dma.hbm_to_vmem [thread:$0]  %s2, 2048, %s234, [#allocation7], 128, 128, 8
        $region20: #{tpu_custom_call.1} parent=11 // pred_fallthru
          _
        // Predicated region
        $region21: #{tpu_custom_call.1} parent=11 // pred_check
          %p240 = pneg %p110
        $region22: #{tpu_custom_call.1} parent=11 // pred_check_branch
          %242 = sbr.rel (%p240) target = $region24
        $region23: #{tpu_custom_call.1} parent=11 // pred_region
          %s244 = ssub.s32 2048, 2048
          %245 = vsyncadd [#allocation10], %s244
          %s246 = sshll.u32 [#allocation9], 4
          %s247 = int_to_ptr.vmem [resolvable:$true] %s246
          %252 = dma.hbm_to_vmem [thread:$0]  %s3, 2048, %s247, [#allocation10], 128, 128, 8
        $region24: #{tpu_custom_call.1} parent=11 // pred_fallthru
          _
        // Predicated region
        $region25: #{tpu_custom_call.1} parent=11 // pred_check
          %p253 = pneg %p131
        $region26: #{tpu_custom_call.1} parent=11 // pred_check_branch
          %255 = sbr.rel (%p253) target = $region28
        $region27: #{tpu_custom_call.1} parent=11 // pred_region
          _
        $region28: #{tpu_custom_call.1} parent=11 // pred_fallthru
          _
        // Predicated region
        $region29: #{tpu_custom_call.1} parent=11 // pred_check
          %p256 = pneg %p152
        $region30: #{tpu_custom_call.1} parent=11 // pred_check_branch
          %258 = sbr.rel (%p256) target = $region32
        $region31: #{tpu_custom_call.1} parent=11 // pred_region
          _
        $region32: #{tpu_custom_call.1} parent=11 // pred_fallthru
          _
        // Predicated region
        $region33: #{tpu_custom_call.1} parent=11 // pred_check
          %p259 = pneg %p173
        $region34: #{tpu_custom_call.1} parent=11 // pred_check_branch
          %261 = sbr.rel (%p259) target = $region36
        $region35: #{tpu_custom_call.1} parent=11 // pred_region
          _
        $region36: #{tpu_custom_call.1} parent=11 // pred_fallthru
          _
      $region12: #{tpu_custom_call.1} parent=5 // pred_fallthru
        _
      %p262 = scmp.lt.s32.totalorder %s21, 2
      // Predicated region
      $region37: #{tpu_custom_call.1} parent=5 // pred_check
        %p263 = pneg %p262
      $region38: #{tpu_custom_call.1} parent=5 // pred_check_branch
        %265 = sbr.rel (%p263) target = $region40
      $region39: #{tpu_custom_call.1} parent=5 // pred_region
        // Predicated region
        $region41: #{tpu_custom_call.1} parent=39 // pred_check
          %p266 = pneg %p41
        $region42: #{tpu_custom_call.1} parent=39 // pred_check_branch
          %268 = sbr.rel (%p266) target = $region44
        $region43: #{tpu_custom_call.1} parent=39 // pred_region
          %s269 = sand.u32 %s31, 1
          %s270 = scalar_lea.sflag [#allocation4], %s269
          %s271 = sand.u32 %s31, 1
          %s272 = smul.addr %s271, 8
          %s273 = scalar_lea.vmem [#allocation3], %s272
          %s275 = ssub.s32 128, 128
          %276 = vsyncadd %s270, %s275
          %s277 = smul.addr %s21, 128
          %s278 = scalar_lea.hbm %s0, %s277
          %s280 = sshll.u32 %s273, 4
          %s281 = int_to_ptr.vmem [resolvable:$true] %s280
          %283 = dma.hbm_to_vmem [thread:$0]  %s278, 128, %s281, %s270
        $region44: #{tpu_custom_call.1} parent=39 // pred_fallthru
          _
      $region40: #{tpu_custom_call.1} parent=5 // pred_fallthru
        _
      %p284 = scmp.le.s32.totalorder 1, %s21
      %p285 = scmp.lt.s32.totalorder %s21, 3
      %p286 = pnand %p284, %p285
      %p287 = pneg %p286
      // Predicated region
      $region45: #{tpu_custom_call.1} parent=5 // pred_check
        _
      $region46: #{tpu_custom_call.1} parent=5 // pred_check_branch
        %289 = sbr.rel (%p286) target = $region48
      $region47: #{tpu_custom_call.1} parent=5 // pred_region
        %s290 = ssub.s32 %s21, 1
        %s291 = sand.u32 %s34, 1
        %s292 = scalar_lea.sflag [#allocation4], %s291
        %s293 = sand.u32 %s34, 1
        %s294 = smul.addr %s293, 8
        %s295 = scalar_lea.vmem [#allocation3], %s294
        // Predicated region
        $region49: #{tpu_custom_call.1} parent=47 // pred_check
          %p296 = pneg %p47
        $region50: #{tpu_custom_call.1} parent=47 // pred_check_branch
          %298 = sbr.rel (%p296) target = $region52
        $region51: #{tpu_custom_call.1} parent=47 // pred_region
          %299 = dma.done %s292, 128
        $region52: #{tpu_custom_call.1} parent=47 // pred_fallthru
          _
        // Predicated region
        $region53: #{tpu_custom_call.1} parent=47 // pred_check
          %p300 = pneg %p68
        $region54: #{tpu_custom_call.1} parent=47 // pred_check_branch
          %302 = sbr.rel (%p300) target = $region56
        $region55: #{tpu_custom_call.1} parent=47 // pred_region
          %303 = dma.done [#allocation7], 2048
        $region56: #{tpu_custom_call.1} parent=47 // pred_fallthru
          _
        // Predicated region
        $region57: #{tpu_custom_call.1} parent=47 // pred_check
          %p304 = pneg %p89
        $region58: #{tpu_custom_call.1} parent=47 // pred_check_branch
          %306 = sbr.rel (%p304) target = $region60
        $region59: #{tpu_custom_call.1} parent=47 // pred_region
          %307 = dma.done [#allocation7], 2048
        $region60: #{tpu_custom_call.1} parent=47 // pred_fallthru
          _
        // Predicated region
        $region61: #{tpu_custom_call.1} parent=47 // pred_check
          %p308 = pneg %p110
        $region62: #{tpu_custom_call.1} parent=47 // pred_check_branch
          %310 = sbr.rel (%p308) target = $region64
        $region63: #{tpu_custom_call.1} parent=47 // pred_region
          %311 = dma.done [#allocation10], 2048
        $region64: #{tpu_custom_call.1} parent=47 // pred_fallthru
          _
        %s312 = sand.u32 %s34, 1
        %s313 = scalar_lea.sflag [#allocation4], %s312
        %s314 = sand.u32 %s34, 1
        %s315 = smul.addr %s314, 8
        %s316 = scalar_lea.vmem [#allocation3], %s315
        %p317 = pneg %p47
        %p318 = pneg %p44
        %p319 = pneg %p68
        %p320 = pneg %p65
        %p321 = pneg %p89
        %p322 = pneg %p86
        %p323 = pneg %p110
        %p324 = pneg %p107
        %p325 = pneg %p131
        %p326 = pneg %p128
        %p327 = pneg %p152
        %p328 = pneg %p149
        %p329 = pneg %p173
        %p330 = pneg %p170
        %p331 = pneg %p199
        %p332 = pneg %p196
        %s333 = sand.u32 %s186, 1
        %s334 = scalar_lea.sflag [#allocation5], %s333
        %s335 = sand.u32 %s186, 1
        %s336 = smul.addr %s335, 8
        %s337 = scalar_lea.vmem [#allocation11], %s336
        %v338 = vld [vmem:[%s295] sm:$0xff]
        %v339 = vld [vmem:[#allocation6] sm:$0xff]
        %v340 = vld [vmem:[#allocation6 + $0x8] sm:$0xff]
        %v341 = vld [vmem:[#allocation6 + $0x10] sm:$0xff]
        %v342 = vld [vmem:[#allocation6 + $0x18] sm:$0xff]
        %v343 = vld [vmem:[#allocation6 + $0x20] sm:$0xff]
        %v344 = vld [vmem:[#allocation6 + $0x28] sm:$0xff]
        %v345 = vld [vmem:[#allocation6 + $0x30] sm:$0xff]
        %v346 = vld [vmem:[#allocation6 + $0x38] sm:$0xff]
        %v347 = vld [vmem:[#allocation6 + $0x40] sm:$0xff]
        %v348 = vld [vmem:[#allocation6 + $0x48] sm:$0xff]
        %v349 = vld [vmem:[#allocation6 + $0x50] sm:$0xff]
        %v350 = vld [vmem:[#allocation6 + $0x58] sm:$0xff]
        %v351 = vld [vmem:[#allocation6 + $0x60] sm:$0xff]
        %v352 = vld [vmem:[#allocation6 + $0x68] sm:$0xff]
        %v353 = vld [vmem:[#allocation6 + $0x70] sm:$0xff]
        %v354 = vld [vmem:[#allocation6 + $0x78] sm:$0xff]
        %v355 = vld [vmem:[%s4] sm:$0x1]
        %v357 = vlaneseq
        %v358 = vshrl.u32 %v357, 7
        %v359 = vsub.s32 0, %v358
        %v360 = vrot.slane %v355, %v359
        %362 = vmatprep.subr.mxu0 0.0
        %363 = vmatpush1.msra.mxu0 %v354
        %364 = vmatprep.subr.mxu0 0.0
        %365 = vmatpush1.msra.mxu0 %v353
        %366 = vmatprep.subr.mxu0 0.0
        %367 = vmatpush1.msra.mxu0 %v352
        %368 = vmatprep.subr.mxu0 0.0
        %369 = vmatpush1.msra.mxu0 %v351
        %370 = vmatprep.subr.mxu0 0.0
        %371 = vmatpush1.msra.mxu0 %v350
        %372 = vmatprep.subr.mxu0 0.0
        %373 = vmatpush1.msra.mxu0 %v349
        %374 = vmatprep.subr.mxu0 0.0
        %375 = vmatpush1.msra.mxu0 %v348
        %376 = vmatprep.subr.mxu0 0.0
        %377 = vmatpush1.msra.mxu0 %v347
        %378 = vmatprep.subr.mxu0 0.0
        %379 = vmatpush1.msra.mxu0 %v346
        %380 = vmatprep.subr.mxu0 0.0
        %381 = vmatpush1.msra.mxu0 %v345
        %382 = vmatprep.subr.mxu0 0.0
        %383 = vmatpush1.msra.mxu0 %v344
        %384 = vmatprep.subr.mxu0 0.0
        %385 = vmatpush1.msra.mxu0 %v343
        %386 = vmatprep.subr.mxu0 0.0
        %387 = vmatpush1.msra.mxu0 %v342
        %388 = vmatprep.subr.mxu0 0.0
        %389 = vmatpush1.msra.mxu0 %v341
        %390 = vmatprep.subr.mxu0 0.0
        %391 = vmatpush1.msra.mxu0 %v340
        %392 = vmatprep.subr.mxu0 0.0
        %393 = vmatpush1.msra.mxu0 %v339
        %394 = vmatprep.subr.mxu0 0.0
        %395 = vmatpush2.msra.mxu0 0.0
        %396 = vmatprep.subr.mxu0 0.0
        %397 = vmatpush2.msra.mxu0 0.0
        %398 = vmatprep.subr.mxu0 0.0
        %399 = vmatpush2.msra.mxu0 0.0
        %400 = vmatprep.subr.mxu0 0.0
        %401 = vmatpush2.msra.mxu0 0.0
        %402 = vmatprep.subr.mxu0 0.0
        %403 = vmatpush2.msra.mxu0 0.0
        %404 = vmatprep.subr.mxu0 0.0
        %405 = vmatpush2.msra.mxu0 0.0
        %406 = vmatprep.subr.mxu0 0.0
        %407 = vmatpush2.msra.mxu0 0.0
        %408 = vmatprep.subr.mxu0 0.0
        %409 = vmatpush2.msra.mxu0 0.0
        %410 = vmatprep.subr.mxu0 0.0
        %411 = vmatpush2.msra.mxu0 0.0
        %412 = vmatprep.subr.mxu0 0.0
        %413 = vmatpush2.msra.mxu0 0.0
        %414 = vmatprep.subr.mxu0 0.0
        %415 = vmatpush2.msra.mxu0 0.0
        %416 = vmatprep.subr.mxu0 0.0
        %417 = vmatpush2.msra.mxu0 0.0
        %418 = vmatprep.subr.mxu0 0.0
        %419 = vmatpush2.msra.mxu0 0.0
        %420 = vmatprep.subr.mxu0 0.0
        %421 = vmatpush2.msra.mxu0 0.0
        %422 = vmatprep.subr.mxu0 0.0
        %423 = vmatpush2.msra.mxu0 0.0
        %424 = vmatprep.subr.mxu0 0.0
        %425 = vmatpush2.msra.mxu0 0.0
        %426 = vmatprep.mubr.f32.mxu0 0.0
        %427 = vmatmul.mubr.f32.gmra.mxu0 %v338
        %v428 = vpop.f32.mrf.mxu0
        %v429 = vadd.f32 %v360, %v428
        %v430 = vpop.f32.mrf.mxu0
        %431 = vdwg.mxu0
        %v432 = vmax.f32 %v429, 0.0
        %433 = vst [vmem:[#allocation2] sm:$0xff] %v432
        %v434 = vld [vmem:[#allocation2] sm:$0xff]
        %v435 = vld [vmem:[#allocation8] sm:$0xff]
        %v436 = vld [vmem:[#allocation8 + $0x8] sm:$0xff]
        %v437 = vld [vmem:[#allocation8 + $0x10] sm:$0xff]
        %v438 = vld [vmem:[#allocation8 + $0x18] sm:$0xff]
        %v439 = vld [vmem:[#allocation8 + $0x20] sm:$0xff]
        %v440 = vld [vmem:[#allocation8 + $0x28] sm:$0xff]
        %v441 = vld [vmem:[#allocation8 + $0x30] sm:$0xff]
        %v442 = vld [vmem:[#allocation8 + $0x38] sm:$0xff]
        %v443 = vld [vmem:[#allocation8 + $0x40] sm:$0xff]
        %v444 = vld [vmem:[#allocation8 + $0x48] sm:$0xff]
        %v445 = vld [vmem:[#allocation8 + $0x50] sm:$0xff]
        %v446 = vld [vmem:[#allocation8 + $0x58] sm:$0xff]
        %v447 = vld [vmem:[#allocation8 + $0x60] sm:$0xff]
        %v448 = vld [vmem:[#allocation8 + $0x68] sm:$0xff]
        %v449 = vld [vmem:[#allocation8 + $0x70] sm:$0xff]
        %v450 = vld [vmem:[#allocation8 + $0x78] sm:$0xff]
        %v451 = vld [vmem:[%s5] sm:$0x1]
        %v453 = vlaneseq
        %v454 = vshrl.u32 %v453, 7
        %v455 = vsub.s32 0, %v454
        %v456 = vrot.slane %v451, %v455
        %458 = vmatprep.subr.mxu0 0.0
        %459 = vmatpush1.msra.mxu0 %v450
        %460 = vmatprep.subr.mxu0 0.0
        %461 = vmatpush1.msra.mxu0 %v449
        %462 = vmatprep.subr.mxu0 0.0
        %463 = vmatpush1.msra.mxu0 %v448
        %464 = vmatprep.subr.mxu0 0.0
        %465 = vmatpush1.msra.mxu0 %v447
        %466 = vmatprep.subr.mxu0 0.0
        %467 = vmatpush1.msra.mxu0 %v446
        %468 = vmatprep.subr.mxu0 0.0
        %469 = vmatpush1.msra.mxu0 %v445
        %470 = vmatprep.subr.mxu0 0.0
        %471 = vmatpush1.msra.mxu0 %v444
        %472 = vmatprep.subr.mxu0 0.0
        %473 = vmatpush1.msra.mxu0 %v443
        %474 = vmatprep.subr.mxu0 0.0
        %475 = vmatpush1.msra.mxu0 %v442
        %476 = vmatprep.subr.mxu0 0.0
        %477 = vmatpush1.msra.mxu0 %v441
        %478 = vmatprep.subr.mxu0 0.0
        %479 = vmatpush1.msra.mxu0 %v440
        %480 = vmatprep.subr.mxu0 0.0
        %481 = vmatpush1.msra.mxu0 %v439
        %482 = vmatprep.subr.mxu0 0.0
        %483 = vmatpush1.msra.mxu0 %v438
        %484 = vmatprep.subr.mxu0 0.0
        %485 = vmatpush1.msra.mxu0 %v437
        %486 = vmatprep.subr.mxu0 0.0
        %487 = vmatpush1.msra.mxu0 %v436
        %488 = vmatprep.subr.mxu0 0.0
        %489 = vmatpush1.msra.mxu0 %v435
        %490 = vmatprep.subr.mxu0 0.0
        %491 = vmatpush2.msra.mxu0 0.0
        %492 = vmatprep.subr.mxu0 0.0
        %493 = vmatpush2.msra.mxu0 0.0
        %494 = vmatprep.subr.mxu0 0.0
        %495 = vmatpush2.msra.mxu0 0.0
        %496 = vmatprep.subr.mxu0 0.0
        %497 = vmatpush2.msra.mxu0 0.0
        %498 = vmatprep.subr.mxu0 0.0
        %499 = vmatpush2.msra.mxu0 0.0
        %500 = vmatprep.subr.mxu0 0.0
        %501 = vmatpush2.msra.mxu0 0.0
        %502 = vmatprep.subr.mxu0 0.0
        %503 = vmatpush2.msra.mxu0 0.0
        %504 = vmatprep.subr.mxu0 0.0
        %505 = vmatpush2.msra.mxu0 0.0
        %506 = vmatprep.subr.mxu0 0.0
        %507 = vmatpush2.msra.mxu0 0.0
        %508 = vmatprep.subr.mxu0 0.0
        %509 = vmatpush2.msra.mxu0 0.0
        %510 = vmatprep.subr.mxu0 0.0
        %511 = vmatpush2.msra.mxu0 0.0
        %512 = vmatprep.subr.mxu0 0.0
        %513 = vmatpush2.msra.mxu0 0.0
        %514 = vmatprep.subr.mxu0 0.0
        %515 = vmatpush2.msra.mxu0 0.0
        %516 = vmatprep.subr.mxu0 0.0
        %517 = vmatpush2.msra.mxu0 0.0
        %518 = vmatprep.subr.mxu0 0.0
        %519 = vmatpush2.msra.mxu0 0.0
        %520 = vmatprep.subr.mxu0 0.0
        %521 = vmatpush2.msra.mxu0 0.0
        %522 = vmatprep.mubr.f32.mxu0 0.0
        %523 = vmatmul.mubr.f32.gmra.mxu0 %v434
        %v524 = vpop.f32.mrf.mxu0
        %v525 = vadd.f32 %v456, %v524
        %v526 = vpop.f32.mrf.mxu0
        %527 = vdwg.mxu0
        %v528 = vmax.f32 %v525, 0.0
        %529 = vst [vmem:[#allocation2] sm:$0xff] %v528
        %v530 = vld [vmem:[#allocation2] sm:$0xff]
        %v531 = vld [vmem:[#allocation9] sm:$0xff]
        %v532 = vld [vmem:[#allocation9 + $0x8] sm:$0xff]
        %v533 = vld [vmem:[#allocation9 + $0x10] sm:$0xff]
        %v534 = vld [vmem:[#allocation9 + $0x18] sm:$0xff]
        %v535 = vld [vmem:[#allocation9 + $0x20] sm:$0xff]
        %v536 = vld [vmem:[#allocation9 + $0x28] sm:$0xff]
        %v537 = vld [vmem:[#allocation9 + $0x30] sm:$0xff]
        %v538 = vld [vmem:[#allocation9 + $0x38] sm:$0xff]
        %v539 = vld [vmem:[#allocation9 + $0x40] sm:$0xff]
        %v540 = vld [vmem:[#allocation9 + $0x48] sm:$0xff]
        %v541 = vld [vmem:[#allocation9 + $0x50] sm:$0xff]
        %v542 = vld [vmem:[#allocation9 + $0x58] sm:$0xff]
        %v543 = vld [vmem:[#allocation9 + $0x60] sm:$0xff]
        %v544 = vld [vmem:[#allocation9 + $0x68] sm:$0xff]
        %v545 = vld [vmem:[#allocation9 + $0x70] sm:$0xff]
        %v546 = vld [vmem:[#allocation9 + $0x78] sm:$0xff]
        %v547 = vld [vmem:[%s6] sm:$0x1]
        %v549 = vlaneseq
        %v550 = vshrl.u32 %v549, 7
        %v551 = vsub.s32 0, %v550
        %v552 = vrot.slane %v547, %v551
        %554 = vmatprep.subr.mxu0 0.0
        %555 = vmatpush1.msra.mxu0 %v546
        %556 = vmatprep.subr.mxu0 0.0
        %557 = vmatpush1.msra.mxu0 %v545
        %558 = vmatprep.subr.mxu0 0.0
        %559 = vmatpush1.msra.mxu0 %v544
        %560 = vmatprep.subr.mxu0 0.0
        %561 = vmatpush1.msra.mxu0 %v543
        %562 = vmatprep.subr.mxu0 0.0
        %563 = vmatpush1.msra.mxu0 %v542
        %564 = vmatprep.subr.mxu0 0.0
        %565 = vmatpush1.msra.mxu0 %v541
        %566 = vmatprep.subr.mxu0 0.0
        %567 = vmatpush1.msra.mxu0 %v540
        %568 = vmatprep.subr.mxu0 0.0
        %569 = vmatpush1.msra.mxu0 %v539
        %570 = vmatprep.subr.mxu0 0.0
        %571 = vmatpush1.msra.mxu0 %v538
        %572 = vmatprep.subr.mxu0 0.0
        %573 = vmatpush1.msra.mxu0 %v537
        %574 = vmatprep.subr.mxu0 0.0
        %575 = vmatpush1.msra.mxu0 %v536
        %576 = vmatprep.subr.mxu0 0.0
        %577 = vmatpush1.msra.mxu0 %v535
        %578 = vmatprep.subr.mxu0 0.0
        %579 = vmatpush1.msra.mxu0 %v534
        %580 = vmatprep.subr.mxu0 0.0
        %581 = vmatpush1.msra.mxu0 %v533
        %582 = vmatprep.subr.mxu0 0.0
        %583 = vmatpush1.msra.mxu0 %v532
        %584 = vmatprep.subr.mxu0 0.0
        %585 = vmatpush1.msra.mxu0 %v531
        %586 = vmatprep.subr.mxu0 0.0
        %587 = vmatpush2.msra.mxu0 0.0
        %588 = vmatprep.subr.mxu0 0.0
        %589 = vmatpush2.msra.mxu0 0.0
        %590 = vmatprep.subr.mxu0 0.0
        %591 = vmatpush2.msra.mxu0 0.0
        %592 = vmatprep.subr.mxu0 0.0
        %593 = vmatpush2.msra.mxu0 0.0
        %594 = vmatprep.subr.mxu0 0.0
        %595 = vmatpush2.msra.mxu0 0.0
        %596 = vmatprep.subr.mxu0 0.0
        %597 = vmatpush2.msra.mxu0 0.0
        %598 = vmatprep.subr.mxu0 0.0
        %599 = vmatpush2.msra.mxu0 0.0
        %600 = vmatprep.subr.mxu0 0.0
        %601 = vmatpush2.msra.mxu0 0.0
        %602 = vmatprep.subr.mxu0 0.0
        %603 = vmatpush2.msra.mxu0 0.0
        %604 = vmatprep.subr.mxu0 0.0
        %605 = vmatpush2.msra.mxu0 0.0
        %606 = vmatprep.subr.mxu0 0.0
        %607 = vmatpush2.msra.mxu0 0.0
        %608 = vmatprep.subr.mxu0 0.0
        %609 = vmatpush2.msra.mxu0 0.0
        %610 = vmatprep.subr.mxu0 0.0
        %611 = vmatpush2.msra.mxu0 0.0
        %612 = vmatprep.subr.mxu0 0.0
        %613 = vmatpush2.msra.mxu0 0.0
        %614 = vmatprep.subr.mxu0 0.0
        %615 = vmatpush2.msra.mxu0 0.0
        %616 = vmatprep.subr.mxu0 0.0
        %617 = vmatpush2.msra.mxu0 0.0
        %618 = vmatprep.mubr.f32.mxu0 0.0
        %619 = vmatmul.mubr.f32.gmra.mxu0 %v530
        %v620 = vpop.f32.mrf.mxu0
        %v621 = vadd.f32 %v552, %v620
        %v622 = vpop.f32.mrf.mxu0
        %623 = vdwg.mxu0
        %624 = vst [vmem:[%s337] sm:$0xff] %v621
        %s625 = sand.u32 %s186, 1
        %s626 = scalar_lea.sflag [#allocation5], %s625
        %s627 = sand.u32 %s186, 1
        %s628 = smul.addr %s627, 8
        %s629 = scalar_lea.vmem [#allocation11], %s628
        // Predicated region
        $region65: #{tpu_custom_call.1} parent=47 // pred_check
          %p630 = pneg %p196
        $region66: #{tpu_custom_call.1} parent=47 // pred_check_branch
          %632 = sbr.rel (%p630) target = $region68
        $region67: #{tpu_custom_call.1} parent=47 // pred_region
          %s634 = ssub.s32 128, 128
          %635 = vsyncadd %s626, %s634
          %s636 = smul.addr %s26, 128
          %s637 = scalar_lea.hbm %s7, %s636
          %s639 = sshll.u32 %s629, 4
          %s640 = int_to_ptr.vmem [resolvable:$true] %s639
          %642 = dma.vmem_to_hbm [thread:$0]  %s640, 128, %s637, %s626
        $region68: #{tpu_custom_call.1} parent=47 // pred_fallthru
          _
      $region48: #{tpu_custom_call.1} parent=5 // pred_fallthru
        _
      %p643 = scmp.le.s32.totalorder 2, %s21
      // Predicated region
      $region69: #{tpu_custom_call.1} parent=5 // pred_check
        %p644 = pneg %p643
      $region70: #{tpu_custom_call.1} parent=5 // pred_check_branch
        %646 = sbr.rel (%p644) target = $region72
      $region71: #{tpu_custom_call.1} parent=5 // pred_region
        %s647 = ssub.s32 %s21, 2
        // Predicated region
        $region73: #{tpu_custom_call.1} parent=71 // pred_check
          %p648 = pneg %p202
        $region74: #{tpu_custom_call.1} parent=71 // pred_check_branch
          %650 = sbr.rel (%p648) target = $region76
        $region75: #{tpu_custom_call.1} parent=71 // pred_region
          %s651 = sand.u32 %s187, 1
          %s652 = scalar_lea.sflag [#allocation5], %s651
          %s653 = sand.u32 %s187, 1
          %s654 = smul.addr %s653, 8
          %s655 = scalar_lea.vmem [#allocation11], %s654
          %656 = dma.done %s652, 128
        $region76: #{tpu_custom_call.1} parent=71 // pred_fallthru
          _
      $region72: #{tpu_custom_call.1} parent=5 // pred_fallthru
        _
    $region6: #{tpu_custom_call.1} parent=1 // loop_footer
      %s25 = sadd.s32 1, %s21
    $region7: #{tpu_custom_call.1} parent=1 // loop_footer_branch
      %20 = sbr.rel target = $region3
    $region8: #{tpu_custom_call.1} parent=1 // loop_exit
      _
    %657 = vsyncpa [#allocation4], 1
    %s658 = scalar_lea.sflag [#allocation4], 1
    %659 = vsyncpa %s658, 1
    %660 = vsyncpa [#allocation7], 1
    %661 = vsyncpa [#allocation10], 1
    %662 = vsyncpa [#allocation5], 1
    %s663 = scalar_lea.sflag [#allocation5], 1
    %664 = vsyncpa %s663, 1

</llo_original>
